<compile_context>
chip_gen: v7x
topology: tpu7x:2x2x1
jax: 0.10.0
libtpu: 0.0.40
codegen_flags: <defaults>
</compile_context>

<pallas_src>
import functools
import math

import jax
import jax.numpy as jnp
from jax.experimental import pallas as pl
from jax.experimental.pallas import tpu as pltpu

_DOT_PREC = jax.lax.Precision.HIGH  # 3-pass f32; exact with 0/1 matrices.


# ---------------------------------------------------------------------------
# Trace-time device / tile sizing helpers
# ---------------------------------------------------------------------------

def _round_up(x, m):
    return ((x + m - 1) // m) * m


def _lcm(a, b):
    return a * b // math.gcd(a, b)


def _sublane_quantum(dtype):
    # (8, 128) tiling for 4-byte dtypes; sublane quantum scales with packing.
    return 8 * max(1, 4 // jnp.dtype(dtype).itemsize)


@functools.lru_cache(maxsize=1)
def _device_caps():
    """Per-generation tile-byte target, scoped-VMEM limit, TensorCore count."""
    kind = ""
    try:
        kind = jax.devices()[0].device_kind.lower()
    except Exception:  # pragma: no cover - defensive
        pass

    vmem_candidates = []
    try:
        get_info = getattr(pltpu, "get_tpu_info", None)
        if get_info is not None:
            cap = getattr(get_info(), "vmem_capacity_bytes", None)
            if cap:
                vmem_candidates.append(int(cap))
    except Exception:  # pragma: no cover - AOT / mock / older builds
        pass
    if "v7" in kind:
        vmem_candidates.append(64 << 20)       # 64 MiB per TensorCore
    elif "v2" in kind or "v3" in kind:
        vmem_candidates.append(16 << 20)
    elif any(g in kind for g in ("v4", "v5", "v6")):
        vmem_candidates.append(128 << 20)
    vmem_cap = min(vmem_candidates) if vmem_candidates else (64 << 20)

    num_tc = 2 if "v7" in kind else 1

    # Scoped limit ~3/4 of physical VMEM; per-step tile target leaves room for
    # in+out double-buffering plus in-kernel f32 temporaries (~8x one block).
    vmem_limit = min((vmem_cap * 3) // 4, 96 << 20)
    target = max(1 << 20, min(16 << 20, vmem_limit // 8))
    return {"target_tile_bytes": target,
            "vmem_limit_bytes": vmem_limit,
            "num_tensorcores": num_tc}


def _pick_block(total, quantum, cap, steps_multiple=1):
    """Block size along one axis.

    Prefers the largest divisor of `total` that is a multiple of `quantum`
    and <= cap; among those, prefers a step count that is a multiple of
    `steps_multiple` (TensorCore balance).  Falls back to a non-dividing block
    (Pallas masks the ragged last step) or the full extent for tiny axes.
    """
    if total <= cap:
        return total                     # single full-extent block (legal)
    cap = max(quantum, cap)
    best = None
    best_pref = None
    d = quantum
    lim = min(cap, total)
    while d <= lim:
        if total % d == 0:
            best = d
            if steps_multiple > 1 and (total // d) % steps_multiple == 0:
                best_pref = d
        d += quantum
    if best_pref is not None and (best is None or best_pref * 2 >= best):
        return best_pref
    if best is not None:
        return best
    fallback = (cap // quantum) * quantum
    if fallback <= 0 or fallback >= total:
        return total
    return fallback                      # ragged tail handled by masking


# ---------------------------------------------------------------------------
# Kernels
# ---------------------------------------------------------------------------

def _ln_rows_kernel(x_ref, w_ref, b_ref, o_ref, *, eps):
    # x_ref: (block_rows, C); w_ref/b_ref: (1, C).  Normalize over last axis.
    x = x_ref[...].astype(jnp.float32)
    mean = jnp.mean(x, axis=-1, keepdims=True)
    xc = x - mean
    var = jnp.mean(xc * xc, axis=-1, keepdims=True)   # biased variance (torch)
    y = xc * jax.lax.rsqrt(var + eps)
    o_ref[...] = (y * w_ref[...].astype(jnp.float32)
                  + b_ref[...].astype(jnp.float32)).astype(o_ref.dtype)


def _ln_rows_packed_dense_kernel(x_ref, seg_ref, w_ref, b_ref, o_ref, *, eps, inv_c):
    # x_ref: (block_rows, 128) with k = 128 // C logical rows packed per lane
    # row.  seg_ref is the hoisted (128, 128) block-diagonal 0/1 matrix; the
    # per-segment sums run on the otherwise-idle MXU.
    x = x_ref[...].astype(jnp.float32)
    seg = seg_ref[...]
    mean = jnp.dot(x, seg, precision=_DOT_PREC,
                   preferred_element_type=jnp.float32) * inv_c
    xc = x - mean
    var = jnp.dot(xc * xc, seg, precision=_DOT_PREC,
                  preferred_element_type=jnp.float32) * inv_c
    y = xc * jax.lax.rsqrt(var + eps)
    o_ref[...] = (y * w_ref[...] + b_ref[...]).astype(o_ref.dtype)


def _ln_rows_packed_factored_kernel(x_ref, pr_ref, pb_ref, w_ref, b_ref, o_ref,
                                    *, eps, inv_c):
    # x_ref: (block_rows, width) with width = k*C a multiple of 128 > 128.
    # pr_ref (width, 128) reduces each width-C lane segment to one column;
    # pb_ref (128, width) broadcasts it back.  This factored form costs
    # O(width) MXU tiles instead of O(width^2) for the dense block-diagonal.
    x = x_ref[...].astype(jnp.float32)
    pr = pr_ref[...]
    pb = pb_ref[...]
    seg_mean = jnp.dot(x, pr, precision=_DOT_PREC,
                       preferred_element_type=jnp.float32) * inv_c     # (rows,128)
    mean = jnp.dot(seg_mean, pb, precision=_DOT_PREC,
                   preferred_element_type=jnp.float32)                 # (rows,width)
    xc = x - mean
    seg_var = jnp.dot(xc * xc, pr, precision=_DOT_PREC,
                      preferred_element_type=jnp.float32) * inv_c      # (rows,128)
    r = jax.lax.rsqrt(seg_var + eps)          # unused columns -> rsqrt(eps), finite
    rfull = jnp.dot(r, pb, precision=_DOT_PREC,
                    preferred_element_type=jnp.float32)                # (rows,width)
    o_ref[...] = (xc * rfull * w_ref[...] + b_ref[...]).astype(o_ref.dtype)


def _ln_channels_first_kernel(x_ref, w_ref, b_ref, o_ref, *, eps):
    # x_ref: (b_block, C, hw_block).  H*W stays on the (dense) lane axis and
    # the reduction runs over the small C axis -- no transposes anywhere.
    x = x_ref[...].astype(jnp.float32)
    mean = jnp.mean(x, axis=1, keepdims=True)
    xc = x - mean
    var = jnp.mean(xc * xc, axis=1, keepdims=True)
    y = xc * jax.lax.rsqrt(var + eps)
    o_ref[...] = (y * w_ref[...].astype(jnp.float32)
                  + b_ref[...].astype(jnp.float32)).astype(o_ref.dtype)


# ---------------------------------------------------------------------------
# Wrappers
# ---------------------------------------------------------------------------

def _layernorm_rows(x2d, weight, bias, eps):
    """LayerNorm over the last axis of a (R, C) array via pallas_call."""
    R, C = x2d.shape
    caps = _device_caps()
    target = caps["target_tile_bytes"]
    num_tc = caps["num_tensorcores"]
    itemsize = jnp.dtype(x2d.dtype).itemsize
    sub_q = _sublane_quantum(x2d.dtype)

    # Lane packing: fold k rows per lane row so the last dim is a multiple of
    # 128 (unmasked vld/vst).  Covers C=32 (k=4), C=96 (k=4, width=384),
    # C=192 (k=2, width=384), etc.
    k = 1
    if C % 128 != 0:
        packed_width = _lcm(C, 128)
        kk = packed_width // C
        if packed_width <= 640 and kk <= 128 and R % kk == 0:
            k = kk
    # TODO(synk): when R % k != 0 or lcm(C, 128) > 640 we keep the plain
    # masked-store path rather than paying a full-array pad copy in XLA.

    w_f32 = weight.astype(jnp.float32)
    b_f32 = bias.astype(jnp.float32)

    if k > 1:
        rows, width = R // k, C * k
        x_in = x2d.reshape(rows, width)                 # free contiguous reshape
        w_in = jnp.tile(w_f32, k).reshape(1, width)
        b_in = jnp.tile(b_f32, k).reshape(1, width)
        seg_idx = jnp.arange(width, dtype=jnp.int32) // C
        if width == 128:
            seg = (seg_idx[:, None] == seg_idx[None, :]).astype(jnp.float32)
            extra_in = [seg]
            extra_specs = [pl.BlockSpec((width, width), lambda i: (0, 0))]
            kernel = functools.partial(_ln_rows_packed_dense_kernel,
                                       eps=eps, inv_c=1.0 / C)
        else:
            cols = jnp.arange(128, dtype=jnp.int32)
            p_red = (seg_idx[:, None] == cols[None, :]).astype(jnp.float32)
            p_bcast = p_red.T
            extra_in = [p_red, p_bcast]
            extra_specs = [pl.BlockSpec((width, 128), lambda i: (0, 0)),
                           pl.BlockSpec((128, width), lambda i: (0, 0))]
            kernel = functools.partial(_ln_rows_packed_factored_kernel,
                                       eps=eps, inv_c=1.0 / C)
    else:
        rows, width = R, C
        x_in = x2d
        w_in = w_f32.reshape(1, C)
        b_in = b_f32.reshape(1, C)
        extra_in = []
        extra_specs = []
        kernel = functools.partial(_ln_rows_kernel, eps=eps)

    # Row-block sizing: account for lane padding and f32 in-kernel temporaries.
    padded_width = _round_up(width, 128)
    row_bytes = padded_width * max(itemsize, 4)
    cap_rows = max(sub_q, target // max(1, row_bytes))
    total_bytes = rows * width * itemsize
    if num_tc > 1 and total_bytes > (1 << 20) and rows >= num_tc * sub_q:
        # Only split to feed a second TensorCore; single-TC chips keep the
        # biggest tile that fits (fewer grid steps -> less per-step overhead).
        cap_rows = min(cap_rows, max(sub_q, rows // num_tc))
    block_rows = _pick_block(rows, sub_q, cap_rows, steps_multiple=num_tc)
    grid = (-(-rows // block_rows),)

    out = pl.pallas_call(
        kernel,
        out_shape=jax.ShapeDtypeStruct((rows, width), x2d.dtype),
        grid_spec=pltpu.PrefetchScalarGridSpec(
            num_scalar_prefetch=0,
            grid=grid,
            in_specs=[pl.BlockSpec((block_rows, width), lambda i: (i, 0))]
                     + extra_specs
                     + [pl.BlockSpec((1, width), lambda i: (0, 0)),
                        pl.BlockSpec((1, width), lambda i: (0, 0))],
            out_specs=pl.BlockSpec((block_rows, width), lambda i: (i, 0)),
        ),
        compiler_params=pltpu.CompilerParams(
            dimension_semantics=("parallel",),
            vmem_limit_bytes=caps["vmem_limit_bytes"],
        ),
    )(x_in, *extra_in, w_in, b_in)

    return out.reshape(R, C)


def _layernorm_channels_first(x, weight, bias, eps):
    """LayerNorm over C of an NCHW array -- transpose-free hot path."""
    B, C, H, W = x.shape
    HW = H * W
    caps = _device_caps()
    target = caps["target_tile_bytes"]
    num_tc = caps["num_tensorcores"]
    itemsize = jnp.dtype(x.dtype).itemsize
    sub_q = _sublane_quantum(x.dtype)

    x3 = x.reshape(B, C, HW)                            # free contiguous reshape

    # Account for sublane padding of small C and f32 upcast temporaries so the
    # larger tile targets cannot overshoot the scoped-VMEM limit on v7x.
    padded_C = _round_up(C, sub_q)
    col_bytes = padded_C * max(itemsize, 4)
    hw_cap = max(128, target // max(1, col_bytes))
    hw_block = _pick_block(HW, 128, hw_cap, steps_multiple=1)
    n_hw = -(-HW // hw_block)

    block_bytes = col_bytes * hw_block
    batch_cap = max(1, target // max(1, block_bytes))
    total_bytes = x.size * itemsize
    if (num_tc > 1 and (n_hw % num_tc != 0) and B > 1
            and total_bytes > (1 << 20)):
        batch_cap = min(batch_cap, max(1, B // num_tc))
    b_block = _pick_block(B, 1, batch_cap,
                          steps_multiple=(num_tc if n_hw % num_tc != 0 else 1))
    n_b = -(-B // b_block)

    w_in = weight.astype(jnp.float32).reshape(1, C, 1)
    b_in = bias.astype(jnp.float32).reshape(1, C, 1)

    out = pl.pallas_call(
        functools.partial(_ln_channels_first_kernel, eps=eps),
        out_shape=jax.ShapeDtypeStruct((B, C, HW), x.dtype),
        grid_spec=pltpu.PrefetchScalarGridSpec(
            num_scalar_prefetch=0,
            grid=(n_b, n_hw),
            in_specs=[
                pl.BlockSpec((b_block, C, hw_block), lambda i, j: (i, 0, j)),
                pl.BlockSpec((1, C, 1), lambda i, j: (0, 0, 0)),
                pl.BlockSpec((1, C, 1), lambda i, j: (0, 0, 0)),
            ],
            out_specs=pl.BlockSpec((b_block, C, hw_block), lambda i, j: (i, 0, j)),
        ),
        compiler_params=pltpu.CompilerParams(
            dimension_semantics=("parallel", "parallel"),
            vmem_limit_bytes=caps["vmem_limit_bytes"],
        ),
    )(x3, w_in, b_in)
    return out.reshape(B, C, H, W)


class LayerNormPallas:
    """Forward-only mirror of the PyTorch LayerNorm module."""

    def __init__(self, normalized_shape, eps=1e-6, data_format="channels_last"):
        if data_format not in ("channels_last", "channels_first"):
            raise NotImplementedError
        self.weight = jnp.ones((normalized_shape,), dtype=jnp.float32)
        self.bias = jnp.zeros((normalized_shape,), dtype=jnp.float32)
        self.eps = eps
        self.data_format = data_format
        self.normalized_shape = normalized_shape

    def __call__(self, x):
        C = self.normalized_shape
        if self.data_format == "channels_last":
            assert x.shape[-1] == C
            lead = x.shape[:-1]
            rows = 1
            for d in lead:
                rows *= d
            y = _layernorm_rows(x.reshape(rows, C), self.weight, self.bias, self.eps)
            return y.reshape(*lead, C)
        else:  # channels_first, x: (B, C, H, W)
            assert x.shape[1] == C
            return _layernorm_channels_first(x, self.weight, self.bias, self.eps)


# ---------------------------------------------------------------------------
# Pure-JAX references (match the PyTorch module)
# ---------------------------------------------------------------------------

def _ref_channels_first(x, w, b, eps):
    u = jnp.mean(x, axis=1, keepdims=True)
    s = jnp.mean((x - u) ** 2, axis=1, keepdims=True)
    xn = (x - u) / jnp.sqrt(s + eps)
    return w[None, :, None, None] * xn + b[None, :, None, None]


def _ref_channels_last(x, w, b, eps):
    u = jnp.mean(x, axis=-1, keepdims=True)
    s = jnp.mean((x - u) ** 2, axis=-1, keepdims=True)
    return (x - u) / jnp.sqrt(s + eps) * w + b


if __name__ == "__main__":
    key = jax.random.PRNGKey(0)
    k1, k2, k3, k4, k5, k6 = jax.random.split(key, 6)

    # channels_first: NCHW (B=2, C=4, H=16, W=16) -- transpose-free kernel.
    x_cf = jax.random.normal(k1, (2, 4, 16, 16), dtype=jnp.float32)
    ln_cf = LayerNormPallas(4, eps=1e-6, data_format="channels_first")
    ln_cf.weight = jax.random.normal(k2, (4,), dtype=jnp.float32)
    ln_cf.bias = jax.random.normal(k3, (4,), dtype=jnp.float32)
    y_cf = jax.block_until_ready(ln_cf(x_cf))
    ref_cf = _ref_channels_first(x_cf, ln_cf.weight, ln_cf.bias, ln_cf.eps)
    assert y_cf.shape == x_cf.shape
    assert jnp.max(jnp.abs(y_cf - ref_cf)) < 1e-4

    # channels_last, C = 32 -> dense lane-packed path (width 128): (2, 8, 8, 32).
    x_cl = jax.random.normal(k4, (2, 8, 8, 32), dtype=jnp.float32)
    ln_cl = LayerNormPallas(32, eps=1e-6, data_format="channels_last")
    ln_cl.weight = jax.random.normal(k5, (32,), dtype=jnp.float32)
    ln_cl.bias = jnp.linspace(-1.0, 1.0, 32, dtype=jnp.float32)
    y_cl = jax.block_until_ready(ln_cl(x_cl))
    ref_cl = _ref_channels_last(x_cl, ln_cl.weight, ln_cl.bias, ln_cl.eps)
    assert y_cl.shape == x_cl.shape
    assert jnp.max(jnp.abs(y_cl - ref_cl)) < 1e-4

    # channels_last, C = 128 -> plain lane-dense path: (2, 4, 4, 128).
    x_cl2 = jax.random.normal(k1, (2, 4, 4, 128), dtype=jnp.float32)
    ln_cl2 = LayerNormPallas(128, eps=1e-6, data_format="channels_last")
    y_cl2 = jax.block_until_ready(ln_cl2(x_cl2))
    ref_cl2 = _ref_channels_last(x_cl2, ln_cl2.weight, ln_cl2.bias, ln_cl2.eps)
    assert y_cl2.shape == x_cl2.shape
    assert jnp.max(jnp.abs(y_cl2 - ref_cl2)) < 1e-4

    # channels_last, C = 96 -> factored lane-packed path (width 384): (2, 4, 8, 96).
    x_cl3 = jax.random.normal(k6, (2, 4, 8, 96), dtype=jnp.float32)
    ln_cl3 = LayerNormPallas(96, eps=1e-6, data_format="channels_last")
    ln_cl3.weight = jax.random.normal(k2, (96,), dtype=jnp.float32)
    ln_cl3.bias = jnp.linspace(-0.5, 0.5, 96, dtype=jnp.float32)
    y_cl3 = jax.block_until_ready(ln_cl3(x_cl3))
    ref_cl3 = _ref_channels_last(x_cl3, ln_cl3.weight, ln_cl3.bias, ln_cl3.eps)
    assert y_cl3.shape == x_cl3.shape
    assert jnp.max(jnp.abs(y_cl3 - ref_cl3)) < 1e-4

    print("KERNEL_OK")
</pallas_src>

<mosaic_0001>
module attributes {stable_mosaic.version = 11 : i64} {
  func.func @_ln_channels_first_kernel(%arg0: i32, %arg1: i32, %arg2: memref<2x4x256xf32, #tpu.memory_space<vmem>>, %arg3: memref<1x4x1xf32, #tpu.memory_space<vmem>>, %arg4: memref<1x4x1xf32, #tpu.memory_space<vmem>>, %arg5: memref<2x4x256xf32, #tpu.memory_space<vmem>>) attributes {dimension_semantics = [#tpu.dimension_semantics<parallel>, #tpu.dimension_semantics<parallel>], iteration_bounds = array<i64: 1, 1>, scalar_prefetch = 0 : i64, scratch_operands = 0 : i64, tpu.core_type = #tpu.core_type<tc>, window_params = [{transform_indices = @transform_0, window_bounds = array<i64: 2, 4, 256>}, {pipeline_mode = #tpu.pipeline_mode<synchronous>, transform_indices = @transform_1, window_bounds = array<i64: 1, 4, 1>}, {pipeline_mode = #tpu.pipeline_mode<synchronous>, transform_indices = @transform_2, window_bounds = array<i64: 1, 4, 1>}, {transform_indices = @transform_3, window_bounds = array<i64: 2, 4, 256>}]} {
    %c0 = arith.constant 0 : index
    %c0_0 = arith.constant 0 : index
    %c0_1 = arith.constant 0 : index
    %0 = vector.load %arg2[%c0, %c0_0, %c0_1] : memref<2x4x256xf32, #tpu.memory_space<vmem>>, vector<2x4x256xf32>
    %cst = arith.constant dense<0.000000e+00> : vector<2x256xf32>
    %1 = vector.multi_reduction <add>, %0, %cst [1] : vector<2x4x256xf32> to vector<2x256xf32>
    %2 = vector.shape_cast %1 : vector<2x256xf32> to vector<2x1x256xf32>
    %cst_2 = arith.constant 4.000000e+00 : f32
    %3 = vector.broadcast %cst_2 : f32 to vector<2x1x256xf32>
    %4 = arith.divf %2, %3 : vector<2x1x256xf32>
    %5 = vector.broadcast %4 : vector<2x1x256xf32> to vector<2x4x256xf32>
    %6 = arith.subf %0, %5 : vector<2x4x256xf32>
    %7 = arith.mulf %6, %6 : vector<2x4x256xf32>
    %cst_3 = arith.constant dense<0.000000e+00> : vector<2x256xf32>
    %8 = vector.multi_reduction <add>, %7, %cst_3 [1] : vector<2x4x256xf32> to vector<2x256xf32>
    %9 = vector.shape_cast %8 : vector<2x256xf32> to vector<2x1x256xf32>
    %cst_4 = arith.constant 4.000000e+00 : f32
    %10 = vector.broadcast %cst_4 : f32 to vector<2x1x256xf32>
    %11 = arith.divf %9, %10 : vector<2x1x256xf32>
    %cst_5 = arith.constant 9.99999997E-7 : f32
    %12 = vector.broadcast %cst_5 : f32 to vector<2x1x256xf32>
    %13 = arith.addf %11, %12 : vector<2x1x256xf32>
    %14 = math.rsqrt %13 : vector<2x1x256xf32>
    %15 = vector.broadcast %14 : vector<2x1x256xf32> to vector<2x4x256xf32>
    %16 = arith.mulf %6, %15 : vector<2x4x256xf32>
    %c0_6 = arith.constant 0 : index
    %c0_7 = arith.constant 0 : index
    %c0_8 = arith.constant 0 : index
    %17 = vector.load %arg3[%c0_6, %c0_7, %c0_8] : memref<1x4x1xf32, #tpu.memory_space<vmem>>, vector<1x4x1xf32>
    %18 = vector.broadcast %17 : vector<1x4x1xf32> to vector<2x4x256xf32>
    %19 = arith.mulf %16, %18 : vector<2x4x256xf32>
    %c0_9 = arith.constant 0 : index
    %c0_10 = arith.constant 0 : index
    %c0_11 = arith.constant 0 : index
    %20 = vector.load %arg4[%c0_9, %c0_10, %c0_11] : memref<1x4x1xf32, #tpu.memory_space<vmem>>, vector<1x4x1xf32>
    %21 = vector.broadcast %20 : vector<1x4x1xf32> to vector<2x4x256xf32>
    %22 = arith.addf %19, %21 : vector<2x4x256xf32>
    %c0_12 = arith.constant 0 : index
    %c0_13 = arith.constant 0 : index
    %c0_14 = arith.constant 0 : index
    %23 = vector.load %arg5[%c0_12, %c0_13, %c0_14] : memref<2x4x256xf32, #tpu.memory_space<vmem>>, vector<2x4x256xf32>
    tpu.vector_store %arg5[%c0_12, %c0_13, %c0_14], %22 {strides = array<i32>} : memref<2x4x256xf32, #tpu.memory_space<vmem>>, vector<2x4x256xf32>,
    return
  }
  func.func @transform_0(%arg0: i32, %arg1: i32) -> (i32, i32, i32) {
    %c0_i32 = arith.constant 0 : i32
    %c0_i32_0 = arith.constant 0 : i32
    return %arg0, %c0_i32, %arg1 : i32, i32, i32
  }
  func.func @transform_1(%arg0: i32, %arg1: i32) -> (i32, i32, i32) {
    %c0_i32 = arith.constant 0 : i32
    %c0_i32_0 = arith.constant 0 : i32
    %c0_i32_1 = arith.constant 0 : i32
    %c0_i32_2 = arith.constant 0 : i32
    return %c0_i32, %c0_i32_0, %c0_i32_1 : i32, i32, i32
  }
  func.func @transform_2(%arg0: i32, %arg1: i32) -> (i32, i32, i32) {
    %c0_i32 = arith.constant 0 : i32
    %c0_i32_0 = arith.constant 0 : i32
    %c0_i32_1 = arith.constant 0 : i32
    %c0_i32_2 = arith.constant 0 : i32
    return %c0_i32, %c0_i32_0, %c0_i32_1 : i32, i32, i32
  }
  func.func @transform_3(%arg0: i32, %arg1: i32) -> (i32, i32, i32) {
    %c0_i32 = arith.constant 0 : i32
    %c0_i32_0 = arith.constant 0 : i32
    return %arg0, %c0_i32, %arg1 : i32, i32, i32
  }
}

</mosaic_0001>

<llo_original>
// kernel: tpu_custom_call.1
$region0: #{tpu_custom_call.1}
  #allocation0 [shape = 'u32[]', space=smem, size = 0x4, offset = 0x4, fixed_abs, tag = 'smem constant byte address 0x4 - core index']
  #allocation1 [shape = 'u32[144,128]{1,0:T(1,128)}', space=vmem, size = 0x12000, scoped, tag = 'internal scratch']
  %s0 = inlined_call_operand.hbm [shape: f32[2,4,256], index: 0, kind: input, shape index: {}]
  %s1 = inlined_call_operand.vmem [shape: f32[1,4,1], index: 1, kind: input, shape index: {}]
  %s2 = inlined_call_operand.vmem [shape: f32[1,4,1], index: 2, kind: input, shape index: {}]
  %s3 = inlined_call_operand.hbm [shape: f32[2,4,256], index: 3, kind: output, shape index: {}]
  %s4 = sld [smem:[#allocation0]]
  $region26: #{tpu_custom_call.1} parent=0
    _
  %s6 = ssub.s32 1, %s4
  %s7 = scalar_select 0, %s6, %s4
  $region1: #{tpu_custom_call.1} parent=0
    #allocation2 [shape = 'u8[8192]{0}', space=vmem, size = 0x2000, scoped, tag = 'input window, operand 0, single buffered']
    #allocation3 [shape = 's32[1]{0}', space=sflag, size = 0x4, scoped, tag = 'scoped memory for tpu_custom_call.1']
    #allocation4 [shape = 's32[1]{0}', space=sflag, size = 0x4, scoped, tag = 'scoped memory for tpu_custom_call.1']
    #allocation5 [shape = 'u8[8192]{0}', space=vmem, size = 0x2000, scoped, tag = 'output window, operand 0, single buffered']
    %8 = vsyncpa [#allocation3], 0
    %9 = vsyncpa [#allocation4], 0
    // Predicated region
    $region2: #{tpu_custom_call.1} parent=1 // pred_check
      _
    $region3: #{tpu_custom_call.1} parent=1 // pred_check_branch
      %11 = sbr.rel (0) target = $region5
    $region4: #{tpu_custom_call.1} parent=1 // pred_region
      %s13 = ssub.s32 256, 256
      %14 = vsyncadd [#allocation3], %s13
      %s15 = sshll.u32 [#allocation2], 4
      %s16 = int_to_ptr.vmem [resolvable:$true] %s15
      %21 = dma.hbm_to_vmem [thread:$0]  %s0, 256, %s16, [#allocation3], 128, 128, 8
    $region5: #{tpu_custom_call.1} parent=1 // pred_fallthru
      _
    // Predicated region
    $region6: #{tpu_custom_call.1} parent=1 // pred_check
      _
    $region7: #{tpu_custom_call.1} parent=1 // pred_check_branch
      %23 = sbr.rel (0) target = $region9
    $region8: #{tpu_custom_call.1} parent=1 // pred_region
      _
    $region9: #{tpu_custom_call.1} parent=1 // pred_fallthru
      _
    // Predicated region
    $region10: #{tpu_custom_call.1} parent=1 // pred_check
      _
    $region11: #{tpu_custom_call.1} parent=1 // pred_check_branch
      %25 = sbr.rel (0) target = $region13
    $region12: #{tpu_custom_call.1} parent=1 // pred_region
      _
    $region13: #{tpu_custom_call.1} parent=1 // pred_fallthru
      _
    // Predicated region
    $region14: #{tpu_custom_call.1} parent=1 // pred_check
      _
    $region15: #{tpu_custom_call.1} parent=1 // pred_check_branch
      %27 = sbr.rel (0) target = $region17
    $region16: #{tpu_custom_call.1} parent=1 // pred_region
      %28 = dma.done [#allocation3], 256
    $region17: #{tpu_custom_call.1} parent=1 // pred_fallthru
      _
    %v29 = vld [vmem:[#allocation2] sm:$0xff]
    %v30 = vld [vmem:[#allocation2 + $0x8] sm:$0xff]
    %v33 = vcombine.high %v29, %v29
    %v34 = vcombine.high %v30, %v30
    %vm37 = vcmask 1043456
    %v38 = vsel %vm37, %v29, 0.0
    %v39 = vrot.slane %v38, 4
    %v40 = vadd.f32 %v38, %v39
    %v41 = vrot.slane %v40, 2
    %v42 = vadd.f32 %v40, %v41
    %v43 = vrot.slane %v42, 1
    %v44 = vadd.f32 %v42, %v43
    %v45 = vsel %vm37, %v33, 0.0
    %v46 = vrot.slane %v45, 4
    %v47 = vadd.f32 %v45, %v46
    %v48 = vrot.slane %v47, 2
    %v49 = vadd.f32 %v47, %v48
    %v50 = vrot.slane %v49, 1
    %v51 = vadd.f32 %v49, %v50
    %v52 = vsel %vm37, %v30, 0.0
    %v53 = vrot.slane %v52, 4
    %v54 = vadd.f32 %v52, %v53
    %v55 = vrot.slane %v54, 2
    %v56 = vadd.f32 %v54, %v55
    %v57 = vrot.slane %v56, 1
    %v58 = vadd.f32 %v56, %v57
    %v59 = vsel %vm37, %v34, 0.0
    %v60 = vrot.slane %v59, 4
    %v61 = vadd.f32 %v59, %v60
    %v62 = vrot.slane %v61, 2
    %v63 = vadd.f32 %v61, %v62
    %v64 = vrot.slane %v63, 1
    %v65 = vadd.f32 %v63, %v64
    %v66 = vrcp.pop 4.0
    %v67 = vmul.f32 %v44, %v66
    %v68 = vmul.f32 %v51, %v66
    %v69 = vmul.f32 %v58, %v66
    %v70 = vmul.f32 %v65, %v66
    %v75 = vcombine.low %v67, %v68
    %v76 = vcombine.low %v69, %v70
    %v79 = vsub.f32 %v29, %v75
    %v80 = vsub.f32 %v30, %v76
    %v81 = vmul.f32 %v79, %v79
    %v82 = vmul.f32 %v80, %v80
    %v85 = vcombine.high %v81, %v81
    %v86 = vcombine.high %v82, %v82
    %v89 = vsel %vm37, %v81, 0.0
    %v90 = vrot.slane %v89, 4
    %v91 = vadd.f32 %v89, %v90
    %v92 = vrot.slane %v91, 2
    %v93 = vadd.f32 %v91, %v92
    %v94 = vrot.slane %v93, 1
    %v95 = vadd.f32 %v93, %v94
    %v96 = vsel %vm37, %v85, 0.0
    %v97 = vrot.slane %v96, 4
    %v98 = vadd.f32 %v96, %v97
    %v99 = vrot.slane %v98, 2
    %v100 = vadd.f32 %v98, %v99
    %v101 = vrot.slane %v100, 1
    %v102 = vadd.f32 %v100, %v101
    %v103 = vsel %vm37, %v82, 0.0
    %v104 = vrot.slane %v103, 4
    %v105 = vadd.f32 %v103, %v104
    %v106 = vrot.slane %v105, 2
    %v107 = vadd.f32 %v105, %v106
    %v108 = vrot.slane %v107, 1
    %v109 = vadd.f32 %v107, %v108
    %v110 = vsel %vm37, %v86, 0.0
    %v111 = vrot.slane %v110, 4
    %v112 = vadd.f32 %v110, %v111
    %v113 = vrot.slane %v112, 2
    %v114 = vadd.f32 %v112, %v113
    %v115 = vrot.slane %v114, 1
    %v116 = vadd.f32 %v114, %v115
    %v117 = vmul.f32 %v95, %v66
    %v118 = vmul.f32 %v102, %v66
    %v119 = vmul.f32 %v109, %v66
    %v120 = vmul.f32 %v116, %v66
    %v121 = vadd.f32 %v117, 1e-06
    %v122 = vadd.f32 %v118, 1e-06
    %v123 = vadd.f32 %v119, 1e-06
    %v124 = vadd.f32 %v120, 1e-06
    %v125 = vrsqrt.pop %v121
    %v126 = vrsqrt.pop %v122
    %v127 = vrsqrt.pop %v123
    %v128 = vrsqrt.pop %v124
    %v133 = vcombine.low %v125, %v126
    %v134 = vcombine.low %v127, %v128
    %v137 = vmul.f32 %v79, %v133
    %v138 = vmul.f32 %v80, %v134
    %v139 = vld [vmem:[%s1] sm:$0xf]
    %141 = vset.pattern.permute.xlu0 0
    %142 = vperm.xlu0 %141, %v139
    %v143 = vpop.permute.xlu0 %142
    %v145 = vunpack.c.l.s4 839922192
    %v146 = vunpack.c.0.s8 %v145
    %v147 = vlaneseq
    %v148 = vshrl.u32 %v147, 7
    %v149 = vsub.s32 %v146, %v148
    %v150 = vrot.slane %v143, %v149
    %v152 = vmul.f32 %v137, %v150
    %v153 = vmul.f32 %v138, %v150
    %v154 = vld [vmem:[%s2] sm:$0xf]
    %156 = vset.pattern.permute.xlu0 0
    %157 = vperm.xlu0 %156, %v154
    %v158 = vpop.permute.xlu0 %157
    %v160 = vunpack.c.l.s4 839922192
    %v161 = vunpack.c.0.s8 %v160
    %v162 = vlaneseq
    %v163 = vshrl.u32 %v162, 7
    %v164 = vsub.s32 %v161, %v163
    %v165 = vrot.slane %v158, %v164
    %v167 = vadd.f32 %v152, %v165
    %v168 = vadd.f32 %v153, %v165
    %169 = vst [vmem:[#allocation5] sm:$0xff] %v167
    %170 = vst [vmem:[#allocation5 + $0x8] sm:$0xff] %v168
    // Predicated region
    $region18: #{tpu_custom_call.1} parent=1 // pred_check
      _
    $region19: #{tpu_custom_call.1} parent=1 // pred_check_branch
      %172 = sbr.rel (0) target = $region21
    $region20: #{tpu_custom_call.1} parent=1 // pred_region
      %s174 = ssub.s32 256, 256
      %175 = vsyncadd [#allocation4], %s174
      %s176 = sshll.u32 [#allocation5], 4
      %s177 = int_to_ptr.vmem [resolvable:$true] %s176
      %182 = dma.vmem_to_hbm [thread:$0]  %s177, 256, %s3, [#allocation4], 128, 128, 8
    $region21: #{tpu_custom_call.1} parent=1 // pred_fallthru
      _
    // Predicated region
    $region22: #{tpu_custom_call.1} parent=1 // pred_check
      _
    $region23: #{tpu_custom_call.1} parent=1 // pred_check_branch
      %184 = sbr.rel (0) target = $region25
    $region24: #{tpu_custom_call.1} parent=1 // pred_region
      %185 = dma.done [#allocation4], 256
    $region25: #{tpu_custom_call.1} parent=1 // pred_fallthru
      _
    %186 = vsyncpa [#allocation3], 1
    %187 = vsyncpa [#allocation4], 1

</llo_original>
